<compile_context>
chip_gen: v7x
topology: tpu7x:2x2x1
jax: 0.10.0
libtpu: 0.0.40
codegen_flags: <defaults>
</compile_context>

<pallas_src>
import jax
import jax.numpy as jnp
from jax.experimental import pallas as pl
from jax.experimental.pallas import tpu as pltpu


def _round_up(x, m):
    return ((x + m - 1) // m) * m


# ---------- kernel 1: fused-concat linear head + per-node squared norm -------
def _proj_norm_kernel(feat_ref, w_ref, b_ref, o_ref):
    # feat_ref: (d_tot_pad, TN)   transposed, concatenated [x; x_h; x_s]
    # w_ref   : (out_pad, d_tot_pad)   W^T, zero-padded
    # b_ref   : (out_pad, 1)
    # o_ref   : (out_pad + 8, TN): rows [0, out_pad) = x_proj^T,
    #           rows [out_pad, out_pad+8) = broadcast ||x_proj||^2 per node.
    out_pad = w_ref.shape[0]
    tn = feat_ref.shape[1]
    acc = jnp.dot(w_ref[...], feat_ref[...], preferred_element_type=jnp.float32)
    acc = acc + b_ref[...]                                     # (out_pad, TN)
    o_ref[0:out_pad, :] = acc
    ns2 = jnp.sum(acc * acc, axis=0, keepdims=True)            # (1, TN)
    o_ref[out_pad:, :] = jnp.broadcast_to(ns2, (8, tn))


# ------- kernel 2: single one-hot gather (features + norms) + cosine ---------
def _cosine_kernel(idx_ref, xpn_ref, out_ref):
    # idx_ref: (1, 2*TE) int32, this tile's [src | dst] endpoints on lanes.
    # xpn_ref: (out_pad + 8, N_pad) resident projected features + norms.
    # out_ref: (1, TE) lane-dense score block.
    xpn = xpn_ref[...]
    n_pad = xpn.shape[1]
    out_pad = xpn.shape[0] - 8
    te = idx_ref.shape[1] // 2

    # Single one-hot for src and dst together: (N_pad, 2*TE); one iota, one
    # compare, one MXU matmul gathers features and norms for both endpoints.
    node_ids = jax.lax.broadcasted_iota(jnp.int32, (n_pad, 2 * te), 0)
    onehot = (node_ids == idx_ref[...]).astype(jnp.float32)
    g = jnp.dot(xpn, onehot, preferred_element_type=jnp.float32)  # (out_pad+8, 2*TE)

    xs, xd = g[0:out_pad, 0:te], g[0:out_pad, te:]
    ns2, nd2 = g[out_pad:out_pad + 1, 0:te], g[out_pad:out_pad + 1, te:]

    dot = jnp.sum(xs * xd, axis=0, keepdims=True)              # (1, TE)
    # matches F.cosine_similarity eps=1e-8:
    #   max(|a||b|, 1e-8) == sqrt(max(|a|^2|b|^2, 1e-16)); rsqrt uses the EUP.
    inv = jax.lax.rsqrt(jnp.maximum(ns2 * nd2, jnp.float32(1e-16)))
    out_ref[...] = dot * inv


# -------------------------------- wrapper ------------------------------------
def link_pred_head(x, x_h, x_s, w, b, edge_label_index, edge_label,
                   *, tile_n=1024, tile_e=256):
    f32 = jnp.float32
    n = x.shape[0]
    d_x, d_h, d_s = x.shape[1], x_h.shape[1], x_s.shape[1]
    d_tot = d_x + d_h + d_s
    out_dim = w.shape[1]
    num_edges = edge_label_index.shape[1]

    out_pad = _round_up(out_dim, 8)          # sublane granularity only, not 128
    out_aug = out_pad + 8                    # + per-node squared-norm rows
    d_tot_pad = _round_up(d_tot, 8)

    tile_n = min(tile_n, _round_up(n, 128))
    n_pad = _round_up(n, tile_n)
    tile_e = min(tile_e, _round_up(num_edges, 128))
    e_pad = _round_up(num_edges, tile_e)
    n_e_tiles = e_pad // tile_e

    # W^T / bias, zero-padded (padded rows of x_proj come out exactly zero and
    # do not perturb dot products or norms).
    w_all_t = jnp.pad(w.astype(f32).T,
                      ((0, out_pad - out_dim), (0, d_tot_pad - d_tot)))
    b_t = jnp.pad(b.astype(f32), (0, out_pad - out_dim)).reshape(out_pad, 1)

    # Fused concat + transpose + zero-pad in one XLA copy: (d_tot_pad, n_pad).
    feat_t = jnp.pad(jnp.concatenate([x, x_h, x_s], axis=-1).astype(f32).T,
                     ((0, d_tot_pad - d_tot), (0, n_pad - n)))

    # Kernel 1: x_proj^T (+ per-node squared norms), tiled over node columns.
    xpn = pl.pallas_call(
        _proj_norm_kernel,
        out_shape=jax.ShapeDtypeStruct((out_aug, n_pad), f32),
        grid_spec=pltpu.PrefetchScalarGridSpec(
            num_scalar_prefetch=0,
            grid=(n_pad // tile_n,),
            in_specs=[
                pl.BlockSpec((d_tot_pad, tile_n), lambda i: (0, i)),
                pl.BlockSpec((out_pad, d_tot_pad), lambda i: (0, 0)),
                pl.BlockSpec((out_pad, 1), lambda i: (0, 0)),
            ],
            out_specs=pl.BlockSpec((out_aug, tile_n), lambda i: (0, i)),
        ),
        compiler_params=pltpu.CompilerParams(
            dimension_semantics=("parallel",),
            vmem_limit_bytes=32 * 1024 * 1024),
    )(feat_t, w_all_t, b_t)

    # Edge endpoints laid out per tile as [src(tile_e) | dst(tile_e)] lanes so
    # the kernel builds one one-hot per tile (padded edges gather node 0 and
    # are sliced off below).
    eli = jnp.pad(edge_label_index.astype(jnp.int32),
                  ((0, 0), (0, e_pad - num_edges)))
    src = eli[0].reshape(n_e_tiles, tile_e)
    dst = eli[1].reshape(n_e_tiles, tile_e)
    idx_cat = jnp.concatenate([src, dst], axis=1).reshape(1, 2 * e_pad)

    # Kernel 2: per-edge-tile one-hot gather + cosine similarity.  The xpn
    # block has a constant index_map so it stays resident across the grid; with
    # out_pad ~ 8-16 rows its footprint (and the per-TC duplicate on v7x) is
    # negligible.
    scores = pl.pallas_call(
        _cosine_kernel,
        out_shape=jax.ShapeDtypeStruct((1, e_pad), f32),
        grid_spec=pltpu.PrefetchScalarGridSpec(
            num_scalar_prefetch=0,
            grid=(n_e_tiles,),
            in_specs=[
                pl.BlockSpec((1, 2 * tile_e), lambda t: (0, t)),
                pl.BlockSpec((out_aug, n_pad), lambda t: (0, 0)),  # resident
            ],
            out_specs=pl.BlockSpec((1, tile_e), lambda t: (0, t)),
        ),
        compiler_params=pltpu.CompilerParams(
            dimension_semantics=("parallel",),
            # 48 MiB is safe on every generation (v7x physical VMEM is 64 MiB);
            # on v6e this could be raised towards ~100 MiB to cover larger N
            # before switching to the tiled/DMA-gather variant.
            vmem_limit_bytes=48 * 1024 * 1024),
    )(idx_cat, xpn)

    return scores[0, :num_edges], edge_label


# -------------------------------- reference ----------------------------------
def _reference(x, x_h, x_s, w, b, edge_label_index):
    xc = jnp.concatenate([x, x_h, x_s], axis=-1)
    xp = xc @ w + b
    xs_ = xp[edge_label_index[0]]
    xd_ = xp[edge_label_index[1]]
    dot = jnp.sum(xs_ * xd_, axis=-1)
    denom = jnp.maximum(
        jnp.linalg.norm(xs_, axis=-1) * jnp.linalg.norm(xd_, axis=-1), 1e-8)
    return dot / denom


if __name__ == "__main__":
    N, D_X, D_H, D_S = 16, 8, 12, 12       # nodes, feature splits
    IN_DIM = D_X + D_H + D_S               # 32
    OUT_DIM = 16
    E = 8                                  # labeled edges

    key = jax.random.PRNGKey(0)
    kx, kh, ks, kw, kb, ke, kl = jax.random.split(key, 7)

    x = jax.random.normal(kx, (N, D_X), dtype=jnp.float32)
    x_h = jax.random.normal(kh, (N, D_H), dtype=jnp.float32)
    x_s = jax.random.normal(ks, (N, D_S), dtype=jnp.float32)

    # nn.Linear(in_dim, out_dim) init (uniform +-1/sqrt(in_dim)), deterministic
    bound = 1.0 / (IN_DIM ** 0.5)
    w = jax.random.uniform(kw, (IN_DIM, OUT_DIM), jnp.float32, -bound, bound)
    b = jax.random.uniform(kb, (OUT_DIM,), jnp.float32, -bound, bound)

    edge_label_index = jax.random.randint(ke, (2, E), 0, N, dtype=jnp.int32)
    edge_label = jax.random.bernoulli(kl, 0.5, (E,)).astype(jnp.float32)

    score, labels = link_pred_head(
        x, x_h, x_s, w, b, edge_label_index, edge_label)
    score = jax.block_until_ready(score)
    labels = jax.block_until_ready(labels)

    ref = _reference(x, x_h, x_s, w, b, edge_label_index)
    assert score.shape == (E,) and labels.shape == (E,)
    assert jnp.allclose(score, ref, atol=1e-5, rtol=1e-5), (score, ref)

    print("KERNEL_OK")
</pallas_src>

<mosaic_0001>
module attributes {stable_mosaic.version = 11 : i64} {
  func.func @_proj_norm_kernel(%arg0: i32, %arg1: memref<32x128xf32, #tpu.memory_space<vmem>>, %arg2: memref<16x32xf32, #tpu.memory_space<vmem>>, %arg3: memref<16x1xf32, #tpu.memory_space<vmem>>, %arg4: memref<24x128xf32, #tpu.memory_space<vmem>>) attributes {dimension_semantics = [#tpu.dimension_semantics<parallel>], iteration_bounds = array<i64: 1>, scalar_prefetch = 0 : i64, scratch_operands = 0 : i64, tpu.core_type = #tpu.core_type<tc>, window_params = [{transform_indices = @transform_0, window_bounds = array<i64: 32, 128>}, {pipeline_mode = #tpu.pipeline_mode<synchronous>, transform_indices = @transform_1, window_bounds = array<i64: 16, 32>}, {pipeline_mode = #tpu.pipeline_mode<synchronous>, transform_indices = @transform_2, window_bounds = array<i64: 16, 1>}, {transform_indices = @transform_3, window_bounds = array<i64: 24, 128>}]} {
    %c0 = arith.constant 0 : index
    %c0_0 = arith.constant 0 : index
    %0 = vector.load %arg2[%c0, %c0_0] : memref<16x32xf32, #tpu.memory_space<vmem>>, vector<16x32xf32>
    %c0_1 = arith.constant 0 : index
    %c0_2 = arith.constant 0 : index
    %1 = vector.load %arg1[%c0_1, %c0_2] : memref<32x128xf32, #tpu.memory_space<vmem>>, vector<32x128xf32>
    %cst = arith.constant dense<0.000000e+00> : vector<16x128xf32>
    %2 = tpu.matmul %0, %1, %cst {dimension_numbers = #tpu.dot_dimension_numbers<[1], [0], [0], [1], [0, 0, 1, 1], [], []>} : vector<16x32xf32>, vector<32x128xf32>, vector<16x128xf32> -> vector<16x128xf32>
    %c0_3 = arith.constant 0 : index
    %c0_4 = arith.constant 0 : index
    %3 = vector.load %arg3[%c0_3, %c0_4] : memref<16x1xf32, #tpu.memory_space<vmem>>, vector<16x1xf32>
    %4 = vector.broadcast %3 : vector<16x1xf32> to vector<16x128xf32>
    %5 = arith.addf %2, %4 : vector<16x128xf32>
    %c0_5 = arith.constant 0 : index
    %c0_6 = arith.constant 0 : index
    %6 = vector.load %arg4[%c0_5, %c0_6] : memref<24x128xf32, #tpu.memory_space<vmem>>, vector<16x128xf32>
    tpu.vector_store %arg4[%c0_5, %c0_6], %5 {strides = array<i32>} : memref<24x128xf32, #tpu.memory_space<vmem>>, vector<16x128xf32>,
    %7 = arith.mulf %5, %5 : vector<16x128xf32>
    %cst_7 = arith.constant dense<0.000000e+00> : vector<128xf32>
    %8 = vector.multi_reduction <add>, %7, %cst_7 [0] : vector<16x128xf32> to vector<128xf32>
    %9 = vector.shape_cast %8 : vector<128xf32> to vector<1x128xf32>
    %10 = vector.shape_cast %9 : vector<1x128xf32> to vector<1x128xf32>
    %11 = vector.broadcast %10 : vector<1x128xf32> to vector<8x128xf32>
    %c16 = arith.constant 16 : index
    %c0_8 = arith.constant 0 : index
    %12 = vector.load %arg4[%c16, %c0_8] : memref<24x128xf32, #tpu.memory_space<vmem>>, vector<8x128xf32>
    tpu.vector_store %arg4[%c16, %c0_8], %11 {strides = array<i32>} : memref<24x128xf32, #tpu.memory_space<vmem>>, vector<8x128xf32>,
    return
  }
  func.func @transform_0(%arg0: i32) -> (i32, i32) {
    %c0_i32 = arith.constant 0 : i32
    %c0_i32_0 = arith.constant 0 : i32
    return %c0_i32, %arg0 : i32, i32
  }
  func.func @transform_1(%arg0: i32) -> (i32, i32) {
    %c0_i32 = arith.constant 0 : i32
    %c0_i32_0 = arith.constant 0 : i32
    %c0_i32_1 = arith.constant 0 : i32
    return %c0_i32, %c0_i32_0 : i32, i32
  }
  func.func @transform_2(%arg0: i32) -> (i32, i32) {
    %c0_i32 = arith.constant 0 : i32
    %c0_i32_0 = arith.constant 0 : i32
    %c0_i32_1 = arith.constant 0 : i32
    return %c0_i32, %c0_i32_0 : i32, i32
  }
  func.func @transform_3(%arg0: i32) -> (i32, i32) {
    %c0_i32 = arith.constant 0 : i32
    %c0_i32_0 = arith.constant 0 : i32
    return %c0_i32, %arg0 : i32, i32
  }
}

</mosaic_0001>

<llo_original>
// kernel: tpu_custom_call.1
$region0: #{tpu_custom_call.1}
  #allocation0 [shape = 'u32[]', space=smem, size = 0x4, offset = 0x4, fixed_abs, tag = 'smem constant byte address 0x4 - core index']
  #allocation1 [shape = 'u32[144,128]{1,0:T(1,128)}', space=vmem, size = 0x12000, scoped, tag = 'internal scratch']
  %s0 = inlined_call_operand.hbm [shape: f32[32,128], index: 0, kind: input, shape index: {}]
  %s1 = inlined_call_operand.vmem [shape: f32[16,32], index: 1, kind: input, shape index: {}]
  %s2 = inlined_call_operand.vmem [shape: f32[16,1], index: 2, kind: input, shape index: {}]
  %s3 = inlined_call_operand.hbm [shape: f32[24,128], index: 3, kind: output, shape index: {}]
  %s4 = sld [smem:[#allocation0]]
  $region26: #{tpu_custom_call.1} parent=0
    _
  %s6 = ssub.s32 1, %s4
  %s7 = scalar_select 0, %s6, %s4
  $region1: #{tpu_custom_call.1} parent=0
    #allocation2 [shape = 'u8[16384]{0}', space=vmem, size = 0x4000, scoped, tag = 'input window, operand 0, single buffered']
    #allocation3 [shape = 's32[1]{0}', space=sflag, size = 0x4, scoped, tag = 'scoped memory for tpu_custom_call.1']
    #allocation4 [shape = 's32[1]{0}', space=sflag, size = 0x4, scoped, tag = 'scoped memory for tpu_custom_call.1']
    #allocation5 [shape = 'u8[12288]{0}', space=vmem, size = 0x3000, scoped, tag = 'output window, operand 0, single buffered']
    %8 = vsyncpa [#allocation3], 0
    %9 = vsyncpa [#allocation4], 0
    // Predicated region
    $region2: #{tpu_custom_call.1} parent=1 // pred_check
      _
    $region3: #{tpu_custom_call.1} parent=1 // pred_check_branch
      %11 = sbr.rel (0) target = $region5
    $region4: #{tpu_custom_call.1} parent=1 // pred_region
      %s13 = ssub.s32 512, 512
      %14 = vsyncadd [#allocation3], %s13
      %s15 = sshll.u32 [#allocation2], 4
      %s16 = int_to_ptr.vmem [resolvable:$true] %s15
      %21 = dma.hbm_to_vmem [thread:$0]  %s0, 512, %s16, [#allocation3], 128, 128, 8
    $region5: #{tpu_custom_call.1} parent=1 // pred_fallthru
      _
    // Predicated region
    $region6: #{tpu_custom_call.1} parent=1 // pred_check
      _
    $region7: #{tpu_custom_call.1} parent=1 // pred_check_branch
      %23 = sbr.rel (0) target = $region9
    $region8: #{tpu_custom_call.1} parent=1 // pred_region
      _
    $region9: #{tpu_custom_call.1} parent=1 // pred_fallthru
      _
    // Predicated region
    $region10: #{tpu_custom_call.1} parent=1 // pred_check
      _
    $region11: #{tpu_custom_call.1} parent=1 // pred_check_branch
      %25 = sbr.rel (0) target = $region13
    $region12: #{tpu_custom_call.1} parent=1 // pred_region
      _
    $region13: #{tpu_custom_call.1} parent=1 // pred_fallthru
      _
    // Predicated region
    $region14: #{tpu_custom_call.1} parent=1 // pred_check
      _
    $region15: #{tpu_custom_call.1} parent=1 // pred_check_branch
      %27 = sbr.rel (0) target = $region17
    $region16: #{tpu_custom_call.1} parent=1 // pred_region
      %28 = dma.done [#allocation3], 512
    $region17: #{tpu_custom_call.1} parent=1 // pred_fallthru
      _
    %v29 = vld [vmem:[%s1] sm:$0xff]
    %v30 = vld [vmem:[%s1 + $0x8] sm:$0xff]
    %v31 = vld [vmem:[#allocation2] sm:$0xff]
    %v32 = vld [vmem:[#allocation2 + $0x8] sm:$0xff]
    %v33 = vld [vmem:[#allocation2 + $0x10] sm:$0xff]
    %v34 = vld [vmem:[#allocation2 + $0x18] sm:$0xff]
    %v35 = vld [vmem:[%s2] sm:$0xff]
    %v36 = vld [vmem:[%s2 + $0x8] sm:$0xff]
    %38 = vset.pattern.permute.xlu0 0
    %39 = vperm.xlu0 %38, %v35
    %v40 = vpop.permute.xlu0 %39
    %43 = vset.pattern.permute.xlu0 0
    %44 = vperm.xlu0 %43, %v36
    %v45 = vpop.permute.xlu0 %44
    %vm47 = vcmask 261120
    %v49 = vsel %vm47, %v29, 0
    %v52 = vsel %vm47, %v30, 0
    %54 = vmatprep.subr.mxu0 0.0
    %55 = vmatpush1.msra.mxu0 %v31
    %56 = vmatprep.subr.mxu0 0.0
    %57 = vmatpush1.msra.mxu0 %v32
    %58 = vmatprep.subr.mxu0 0.0
    %59 = vmatpush1.msra.mxu0 %v33
    %60 = vmatprep.subr.mxu0 0.0
    %61 = vmatpush1.msra.mxu0 %v34
    %62 = vmatprep.subr.mxu0 0.0
    %63 = vmatpush1.msra.mxu0 0.0
    %64 = vmatprep.subr.mxu0 0.0
    %65 = vmatpush1.msra.mxu0 0.0
    %66 = vmatprep.subr.mxu0 0.0
    %67 = vmatpush1.msra.mxu0 0.0
    %68 = vmatprep.subr.mxu0 0.0
    %69 = vmatpush1.msra.mxu0 0.0
    %70 = vmatprep.subr.mxu0 0.0
    %71 = vmatpush1.msra.mxu0 0.0
    %72 = vmatprep.subr.mxu0 0.0
    %73 = vmatpush1.msra.mxu0 0.0
    %74 = vmatprep.subr.mxu0 0.0
    %75 = vmatpush1.msra.mxu0 0.0
    %76 = vmatprep.subr.mxu0 0.0
    %77 = vmatpush1.msra.mxu0 0.0
    %78 = vmatprep.subr.mxu0 0.0
    %79 = vmatpush1.msra.mxu0 0.0
    %80 = vmatprep.subr.mxu0 0.0
    %81 = vmatpush1.msra.mxu0 0.0
    %82 = vmatprep.subr.mxu0 0.0
    %83 = vmatpush1.msra.mxu0 0.0
    %84 = vmatprep.subr.mxu0 0.0
    %85 = vmatpush1.msra.mxu0 0.0
    %86 = vmatprep.subr.mxu0 0.0
    %87 = vmatpush1.msra.mxu0 0.0
    %88 = vmatprep.subr.mxu0 0.0
    %89 = vmatpush1.msra.mxu0 0.0
    %90 = vmatprep.subr.mxu0 0.0
    %91 = vmatpush1.msra.mxu0 0.0
    %92 = vmatprep.subr.mxu0 0.0
    %93 = vmatpush1.msra.mxu0 0.0
    %94 = vmatprep.subr.mxu0 0.0
    %95 = vmatpush1.msra.mxu0 0.0
    %96 = vmatprep.subr.mxu0 0.0
    %97 = vmatpush1.msra.mxu0 0.0
    %98 = vmatprep.subr.mxu0 0.0
    %99 = vmatpush1.msra.mxu0 0.0
    %100 = vmatprep.subr.mxu0 0.0
    %101 = vmatpush1.msra.mxu0 0.0
    %102 = vmatprep.subr.mxu0 0.0
    %103 = vmatpush1.msra.mxu0 0.0
    %104 = vmatprep.subr.mxu0 0.0
    %105 = vmatpush1.msra.mxu0 0.0
    %106 = vmatprep.subr.mxu0 0.0
    %107 = vmatpush1.msra.mxu0 0.0
    %108 = vmatprep.subr.mxu0 0.0
    %109 = vmatpush1.msra.mxu0 0.0
    %110 = vmatprep.subr.mxu0 0.0
    %111 = vmatpush1.msra.mxu0 0.0
    %112 = vmatprep.subr.mxu0 0.0
    %113 = vmatpush1.msra.mxu0 0.0
    %114 = vmatprep.subr.mxu0 0.0
    %115 = vmatpush1.msra.mxu0 0.0
    %116 = vmatprep.subr.mxu0 0.0
    %117 = vmatpush1.msra.mxu0 0.0
    %118 = vmatprep.mubr.f32.mxu0 0.0
    %119 = vmatmul.mubr.f32.gmra.mrb[0].mxu0 %v49
    %v120 = vpop.f32.mrb[0].mxu0
    %v121 = vadd.f32 %v40, %v120
    %v122 = vpop.f32.mrb[0].mxu0
    %123 = vmatprep.mubr.f32.mxu0 0.0
    %124 = vmatmul.mubr.f32.gmra.mrb[0].mxu0 %v52
    %v125 = vpop.f32.mrb[0].mxu0
    %v126 = vadd.f32 %v45, %v125
    %v127 = vpop.f32.mrb[0].mxu0
    %128 = vdwg.mxu0
    %129 = vst [vmem:[#allocation5] sm:$0xff] %v121
    %130 = vst [vmem:[#allocation5 + $0x8] sm:$0xff] %v126
    %v131 = vmul.f32 %v121, %v121
    %v132 = vmul.f32 %v126, %v126
    %v133 = vadd.f32 %v131, %v132
    %v134 = vrot.slane %v133, 4
    %v135 = vadd.f32 %v133, %v134
    %v136 = vrot.slane %v135, 2
    %v137 = vadd.f32 %v135, %v136
    %v138 = vrot.slane %v137, 1
    %v139 = vadd.f32 %v137, %v138
    %140 = vst [vmem:[#allocation5 + $0x10] sm:$0xff] %v139
    // Predicated region
    $region18: #{tpu_custom_call.1} parent=1 // pred_check
      _
    $region19: #{tpu_custom_call.1} parent=1 // pred_check_branch
      %142 = sbr.rel (0) target = $region21
    $region20: #{tpu_custom_call.1} parent=1 // pred_region
      %s144 = ssub.s32 384, 384
      %145 = vsyncadd [#allocation4], %s144
      %s146 = sshll.u32 [#allocation5], 4
      %s147 = int_to_ptr.vmem [resolvable:$true] %s146
      %152 = dma.vmem_to_hbm [thread:$0]  %s147, 384, %s3, [#allocation4], 128, 128, 8
    $region21: #{tpu_custom_call.1} parent=1 // pred_fallthru
      _
    // Predicated region
    $region22: #{tpu_custom_call.1} parent=1 // pred_check
      _
    $region23: #{tpu_custom_call.1} parent=1 // pred_check_branch
      %154 = sbr.rel (0) target = $region25
    $region24: #{tpu_custom_call.1} parent=1 // pred_region
      %155 = dma.done [#allocation4], 384
    $region25: #{tpu_custom_call.1} parent=1 // pred_fallthru
      _
    %156 = vsyncpa [#allocation3], 1
    %157 = vsyncpa [#allocation4], 1

</llo_original>
